<compile_context>
chip_gen: v5e
topology: v5e:2x2
jax: 0.10.0
libtpu: 0.0.40
codegen_flags: <defaults>
</compile_context>

<pallas_src>
import functools

import jax
import jax.numpy as jnp
from jax.experimental import pallas as pl
from jax.experimental.pallas import tpu as pltpu

LN_EPS = 1e-5  # PyTorch nn.LayerNorm default eps


def _round_up(a, m):
    return (a + m - 1) // m * m


def _mix32(v):
    """splitmix32-style integer hash on uint32 arrays (pure VPU ops)."""
    v = v ^ (v >> jnp.uint32(16))
    v = v * jnp.uint32(0x7FEB352D)
    v = v ^ (v >> jnp.uint32(15))
    v = v * jnp.uint32(0x846CA68B)
    v = v ^ (v >> jnp.uint32(16))
    return v


def _sublayer_kernel(seed_ref, x_ref, w_ref, b_ref, g_ref, beta_ref, o_ref,
                     *, p_dropout, training, d_true):
    tile_n, d_pad = x_ref.shape
    x = x_ref[...].astype(jnp.float32)

    # ---- LayerNorm over the true feature dim (VPU, f32 stats) ----
    if d_pad == d_true:
        mean = jnp.mean(x, axis=-1, keepdims=True)
        var = jnp.mean(jnp.square(x - mean), axis=-1, keepdims=True)
    else:
        # Feature dim is zero-padded to a multiple of 128 (lane-dense).  The
        # padded columns are zero, so sums over the full row equal sums over
        # the true D columns; use E[x^2] - mean^2 to avoid an explicit mask.
        inv_d = 1.0 / d_true
        mean = jnp.sum(x, axis=-1, keepdims=True) * inv_d
        msq = jnp.sum(x * x, axis=-1, keepdims=True) * inv_d
        var = jnp.maximum(msq - mean * mean, 0.0)
    xn = (x - mean) * jax.lax.rsqrt(var + LN_EPS)
    y = xn * g_ref[...].astype(jnp.float32) + beta_ref[...].astype(jnp.float32)

    # ---- sublayer: Linear(D, D) on the MXU ----
    # Run the matmul in the weights' dtype (bf16 weights -> bf16 MXU on
    # v6e/v7x) while accumulating in f32.
    z = jnp.dot(y.astype(w_ref.dtype), w_ref[...],
                preferred_element_type=jnp.float32)
    z = z + b_ref[...].astype(jnp.float32)

    # ---- dropout (train mode only): stateless per-element hash PRNG ----
    if training and p_dropout > 0.0:
        row = jax.lax.broadcasted_iota(jnp.int32, (tile_n, d_pad), 0)
        col = jax.lax.broadcasted_iota(jnp.int32, (tile_n, d_pad), 1)
        row = row.astype(jnp.uint32) + (pl.program_id(0) * tile_n).astype(jnp.uint32)
        idx = row * jnp.uint32(d_pad) + col.astype(jnp.uint32)
        seed_u = seed_ref[0].astype(jnp.uint32) * jnp.uint32(0x9E3779B9)
        bits = _mix32(idx ^ seed_u)
        # integer-threshold compare on the top 24 bits (no float convert/mul)
        r24 = (bits >> jnp.uint32(8)).astype(jnp.int32)
        thresh = jnp.int32(min(int(round(p_dropout * (1 << 24))), 1 << 24))
        keep = r24 >= thresh                      # P(keep) = 1 - p
        z = jnp.where(keep, z * (1.0 / (1.0 - p_dropout)), 0.0)

    # ---- residual add ----
    o_ref[...] = (x + z).astype(o_ref.dtype)


def sublayer_connection(x, w, b, gamma, beta, *, p_dropout=0.1,
                        training=False, seed=0):
    B, S, D = x.shape
    N = B * S

    # Lane-dense feature dim (multiple of 128) and row tiling for pipelining.
    d_pad = _round_up(max(D, 128), 128)
    tile_n = 256 if N >= 256 else _round_up(N, 8)   # MXU-friendly row tile
    n_pad = _round_up(N, tile_n)

    x2 = x.reshape(N, D)
    if (n_pad, d_pad) != (N, D):
        x2 = jnp.pad(x2, ((0, n_pad - N), (0, d_pad - D)))
    w_p = w if d_pad == D else jnp.pad(w, ((0, d_pad - D), (0, d_pad - D)))

    def _row(v):
        v = v.reshape(1, D)
        return v if d_pad == D else jnp.pad(v, ((0, 0), (0, d_pad - D)))

    b_p, g_p, beta_p = _row(b), _row(gamma), _row(beta)
    seed_arr = jnp.array([seed], dtype=jnp.int32)

    kernel = functools.partial(_sublayer_kernel,
                               p_dropout=float(p_dropout),
                               training=bool(training),
                               d_true=D)

    out = pl.pallas_call(
        kernel,
        out_shape=jax.ShapeDtypeStruct((n_pad, d_pad), x.dtype),
        grid_spec=pltpu.PrefetchScalarGridSpec(
            num_scalar_prefetch=1,                # dropout seed lands in SMEM
            grid=(n_pad // tile_n,),              # tile over rows -> pipelined
            in_specs=[
                pl.BlockSpec((tile_n, d_pad), lambda i, seed: (i, 0)),  # x tile
                pl.BlockSpec((d_pad, d_pad), lambda i, seed: (0, 0)),   # W (resident)
                pl.BlockSpec((1, d_pad), lambda i, seed: (0, 0)),       # bias
                pl.BlockSpec((1, d_pad), lambda i, seed: (0, 0)),       # ln gamma
                pl.BlockSpec((1, d_pad), lambda i, seed: (0, 0)),       # ln beta
            ],
            out_specs=pl.BlockSpec((tile_n, d_pad), lambda i, seed: (i, 0)),
        ),
        compiler_params=pltpu.CompilerParams(
            # Row tiles are independent -> shard across both TCs on v7x.
            dimension_semantics=("parallel",)),
        # NOTE: for large D (e.g. 4096) raise vmem_limit_bytes and keep
        # tile_n such that 2*2*tile_n*d_pad*dtype + d_pad^2*dtype fits VMEM
        # (64 MiB/TC on v7x, 128 MiB on v5e/v6e).
    )(seed_arr, x2, w_p, b_p, g_p, beta_p)

    return out[:N, :D].reshape(B, S, D)


def _reference_eval(x, w, b, gamma, beta):
    # pure-JAX reference for eval mode (dropout == identity)
    mean = jnp.mean(x, axis=-1, keepdims=True)
    var = jnp.mean(jnp.square(x - mean), axis=-1, keepdims=True)
    xn = (x - mean) / jnp.sqrt(var + LN_EPS)
    y = xn * gamma + beta
    z = jnp.einsum("bsd,de->bse", y, w) + b
    return x + z


def _make_inputs(key, B, S, D):
    kx, kw, kb = jax.random.split(key, 3)
    x = jax.random.normal(kx, (B, S, D), dtype=jnp.float32)
    w = jax.random.normal(kw, (D, D), dtype=jnp.float32) * (1.0 / D ** 0.5)
    b = jax.random.normal(kb, (D,), dtype=jnp.float32) * 0.01
    gamma = jnp.ones((D,), dtype=jnp.float32)   # nn.LayerNorm default weight
    beta = jnp.zeros((D,), dtype=jnp.float32)   # nn.LayerNorm default bias
    return x, w, b, gamma, beta


if __name__ == "__main__":
    key = jax.random.PRNGKey(0)
    k1, k2 = jax.random.split(key)

    # --- case 1: lane-dense D (multiple of 128), eval + train modes ---
    B, S, D = 2, 8, 128
    x, w, b, gamma, beta = _make_inputs(k1, B, S, D)

    out_eval = sublayer_connection(x, w, b, gamma, beta,
                                   p_dropout=0.1, training=False)
    jax.block_until_ready(out_eval)
    ref = _reference_eval(x, w, b, gamma, beta)
    assert jnp.allclose(out_eval, ref, atol=1e-4, rtol=1e-4), \
        f"eval max abs err {jnp.max(jnp.abs(out_eval - ref))}"

    out_train = sublayer_connection(x, w, b, gamma, beta,
                                    p_dropout=0.1, training=True, seed=42)
    jax.block_until_ready(out_train)
    out_train2 = sublayer_connection(x, w, b, gamma, beta,
                                     p_dropout=0.1, training=True, seed=42)
    jax.block_until_ready(out_train2)
    assert jnp.array_equal(out_train, out_train2), "dropout not deterministic for fixed seed"
    assert bool(jnp.all(jnp.isfinite(out_train)))
    # dropped elements have z == 0, i.e. out == x exactly; ~10% expected
    drop_frac = float(jnp.mean((out_train == x).astype(jnp.float32)))
    assert 0.02 < drop_frac < 0.25, f"unexpected dropout fraction {drop_frac}"

    # --- case 2: D not a multiple of 128 exercises the padding path ---
    B2, S2, D2 = 2, 8, 32
    x2_, w2, b2, g2, be2 = _make_inputs(k2, B2, S2, D2)
    out_eval2 = sublayer_connection(x2_, w2, b2, g2, be2,
                                    p_dropout=0.1, training=False)
    jax.block_until_ready(out_eval2)
    ref2 = _reference_eval(x2_, w2, b2, g2, be2)
    assert jnp.allclose(out_eval2, ref2, atol=1e-4, rtol=1e-4), \
        f"padded eval max abs err {jnp.max(jnp.abs(out_eval2 - ref2))}"

    print("KERNEL_OK")
</pallas_src>

<mosaic_0001>
module attributes {stable_mosaic.version = 11 : i64} {
  func.func @_sublayer_kernel(%arg0: i32, %arg1: memref<1xi32, #tpu.memory_space<smem>>, %arg2: memref<16x128xf32, #tpu.memory_space<vmem>>, %arg3: memref<128x128xf32, #tpu.memory_space<vmem>>, %arg4: memref<1x128xf32, #tpu.memory_space<vmem>>, %arg5: memref<1x128xf32, #tpu.memory_space<vmem>>, %arg6: memref<1x128xf32, #tpu.memory_space<vmem>>, %arg7: memref<16x128xf32, #tpu.memory_space<vmem>>) attributes {dimension_semantics = [#tpu.dimension_semantics<parallel>], iteration_bounds = array<i64: 1>, scalar_prefetch = 1 : i64, scratch_operands = 0 : i64, tpu.core_type = #tpu.core_type<tc>, window_params = [{transform_indices = @transform_0, window_bounds = array<i64: 16, 128>}, {pipeline_mode = #tpu.pipeline_mode<synchronous>, transform_indices = @transform_1, window_bounds = array<i64: 128, 128>}, {pipeline_mode = #tpu.pipeline_mode<synchronous>, transform_indices = @transform_2, window_bounds = array<i64: 1, 128>}, {pipeline_mode = #tpu.pipeline_mode<synchronous>, transform_indices = @transform_3, window_bounds = array<i64: 1, 128>}, {pipeline_mode = #tpu.pipeline_mode<synchronous>, transform_indices = @transform_4, window_bounds = array<i64: 1, 128>}, {transform_indices = @transform_5, window_bounds = array<i64: 16, 128>}]} {
    %c0 = arith.constant 0 : index
    %c0_0 = arith.constant 0 : index
    %0 = vector.load %arg2[%c0, %c0_0] : memref<16x128xf32, #tpu.memory_space<vmem>>, vector<16x128xf32>
    %cst = arith.constant dense<0.000000e+00> : vector<16xf32>
    %1 = vector.multi_reduction <add>, %0, %cst [1] : vector<16x128xf32> to vector<16xf32>
    %2 = vector.shape_cast %1 : vector<16xf32> to vector<16x1xf32>
    %cst_1 = arith.constant 1.280000e+02 : f32
    %3 = vector.broadcast %cst_1 : f32 to vector<16x1xf32>
    %4 = arith.divf %2, %3 : vector<16x1xf32>
    %5 = vector.broadcast %4 : vector<16x1xf32> to vector<16x128xf32>
    %6 = arith.subf %0, %5 : vector<16x128xf32>
    %7 = arith.mulf %6, %6 : vector<16x128xf32>
    %cst_2 = arith.constant dense<0.000000e+00> : vector<16xf32>
    %8 = vector.multi_reduction <add>, %7, %cst_2 [1] : vector<16x128xf32> to vector<16xf32>
    %9 = vector.shape_cast %8 : vector<16xf32> to vector<16x1xf32>
    %cst_3 = arith.constant 1.280000e+02 : f32
    %10 = vector.broadcast %cst_3 : f32 to vector<16x1xf32>
    %11 = arith.divf %9, %10 : vector<16x1xf32>
    %12 = vector.broadcast %4 : vector<16x1xf32> to vector<16x128xf32>
    %13 = arith.subf %0, %12 : vector<16x128xf32>
    %cst_4 = arith.constant 9.99999974E-6 : f32
    %14 = vector.broadcast %cst_4 : f32 to vector<16x1xf32>
    %15 = arith.addf %11, %14 : vector<16x1xf32>
    %16 = math.rsqrt %15 : vector<16x1xf32>
    %17 = vector.broadcast %16 : vector<16x1xf32> to vector<16x128xf32>
    %18 = arith.mulf %13, %17 : vector<16x128xf32>
    %c0_5 = arith.constant 0 : index
    %c0_6 = arith.constant 0 : index
    %19 = vector.load %arg5[%c0_5, %c0_6] : memref<1x128xf32, #tpu.memory_space<vmem>>, vector<1x128xf32>
    %20 = vector.broadcast %19 : vector<1x128xf32> to vector<16x128xf32>
    %21 = arith.mulf %18, %20 : vector<16x128xf32>
    %c0_7 = arith.constant 0 : index
    %c0_8 = arith.constant 0 : index
    %22 = vector.load %arg6[%c0_7, %c0_8] : memref<1x128xf32, #tpu.memory_space<vmem>>, vector<1x128xf32>
    %23 = vector.broadcast %22 : vector<1x128xf32> to vector<16x128xf32>
    %24 = arith.addf %21, %23 : vector<16x128xf32>
    %c0_9 = arith.constant 0 : index
    %c0_10 = arith.constant 0 : index
    %25 = vector.load %arg3[%c0_9, %c0_10] : memref<128x128xf32, #tpu.memory_space<vmem>>, vector<128x128xf32>
    %cst_11 = arith.constant dense<0.000000e+00> : vector<16x128xf32>
    %26 = tpu.matmul %24, %25, %cst_11 {dimension_numbers = #tpu.dot_dimension_numbers<[1], [0], [0], [1], [0, 0, 1, 1], [], []>} : vector<16x128xf32>, vector<128x128xf32>, vector<16x128xf32> -> vector<16x128xf32>
    %c0_12 = arith.constant 0 : index
    %c0_13 = arith.constant 0 : index
    %27 = vector.load %arg4[%c0_12, %c0_13] : memref<1x128xf32, #tpu.memory_space<vmem>>, vector<1x128xf32>
    %28 = vector.broadcast %27 : vector<1x128xf32> to vector<16x128xf32>
    %29 = arith.addf %26, %28 : vector<16x128xf32>
    %30 = arith.addf %0, %29 : vector<16x128xf32>
    %c0_14 = arith.constant 0 : index
    %c0_15 = arith.constant 0 : index
    %31 = vector.load %arg7[%c0_14, %c0_15] : memref<16x128xf32, #tpu.memory_space<vmem>>, vector<16x128xf32>
    tpu.vector_store %arg7[%c0_14, %c0_15], %30 {strides = array<i32>} : memref<16x128xf32, #tpu.memory_space<vmem>>, vector<16x128xf32>,
    return
  }
  func.func @transform_0(%arg0: i32, %arg1: memref<1xi32, #tpu.memory_space<smem>>) -> (i32, i32) {
    %c0_i32 = arith.constant 0 : i32
    %c0_i32_0 = arith.constant 0 : i32
    return %arg0, %c0_i32 : i32, i32
  }
  func.func @transform_1(%arg0: i32, %arg1: memref<1xi32, #tpu.memory_space<smem>>) -> (i32, i32) {
    %c0_i32 = arith.constant 0 : i32
    %c0_i32_0 = arith.constant 0 : i32
    %c0_i32_1 = arith.constant 0 : i32
    return %c0_i32, %c0_i32_0 : i32, i32
  }
  func.func @transform_2(%arg0: i32, %arg1: memref<1xi32, #tpu.memory_space<smem>>) -> (i32, i32) {
    %c0_i32 = arith.constant 0 : i32
    %c0_i32_0 = arith.constant 0 : i32
    %c0_i32_1 = arith.constant 0 : i32
    return %c0_i32, %c0_i32_0 : i32, i32
  }
  func.func @transform_3(%arg0: i32, %arg1: memref<1xi32, #tpu.memory_space<smem>>) -> (i32, i32) {
    %c0_i32 = arith.constant 0 : i32
    %c0_i32_0 = arith.constant 0 : i32
    %c0_i32_1 = arith.constant 0 : i32
    return %c0_i32, %c0_i32_0 : i32, i32
  }
  func.func @transform_4(%arg0: i32, %arg1: memref<1xi32, #tpu.memory_space<smem>>) -> (i32, i32) {
    %c0_i32 = arith.constant 0 : i32
    %c0_i32_0 = arith.constant 0 : i32
    %c0_i32_1 = arith.constant 0 : i32
    return %c0_i32, %c0_i32_0 : i32, i32
  }
  func.func @transform_5(%arg0: i32, %arg1: memref<1xi32, #tpu.memory_space<smem>>) -> (i32, i32) {
    %c0_i32 = arith.constant 0 : i32
    %c0_i32_0 = arith.constant 0 : i32
    return %arg0, %c0_i32 : i32, i32
  }
}

</mosaic_0001>

<llo_original>
// kernel: tpu_custom_call.1
$region0: #{tpu_custom_call.1}
  #allocation0 [shape = 'u32[]', space=smem, size = 0x4, offset = 0x4, fixed_abs, tag = 'smem constant byte address 0x4 - core index']
  #allocation1 [shape = 'u32[72,128]{1,0:T(1,128)}', space=vmem, size = 0x9000, scoped, tag = 'internal scratch']
  #allocation2 [shape = 's32[1]{0}', space=sflag, size = 0x4, scoped, tag = 'scoped memory for tpu_custom_call.1']
  #allocation3 [shape = 's32[1]{0:T(128)S(6)}', space=smem, size = 0x200, scoped, tag = 'prefetched SMEM operand 0']
  %s0 = inlined_call_operand.<no memory space> [shape: s32[1], index: 0, kind: input, shape index: {}]
  %s1 = inlined_call_operand.hbm [shape: f32[16,128], index: 1, kind: input, shape index: {}]
  %s2 = inlined_call_operand.hbm [shape: f32[128,128], index: 2, kind: input, shape index: {}]
  %s3 = inlined_call_operand.vmem [shape: f32[1,128], index: 3, kind: input, shape index: {}]
  %s4 = inlined_call_operand.vmem [shape: f32[1,128], index: 4, kind: input, shape index: {}]
  %s5 = inlined_call_operand.vmem [shape: f32[1,128], index: 5, kind: input, shape index: {}]
  %s6 = inlined_call_operand.hbm [shape: f32[16,128], index: 6, kind: output, shape index: {}]
  %s7 = sld [smem:[#allocation0]]
  $region38: #{tpu_custom_call.1} parent=0
    _
  %s9 = ssub.s32 1, %s7
  %s10 = scalar_select 0, %s9, %s7
  %11 = sst [smem:[#allocation3]] %s0
  $region1: #{tpu_custom_call.1} parent=0
    #allocation4 [shape = 'u8[8192]{0}', space=vmem, size = 0x2000, scoped, tag = 'input window, operand 1, single buffered']
    #allocation5 [shape = 's32[1]{0}', space=sflag, size = 0x4, scoped, tag = 'scoped memory for tpu_custom_call.1']
    #allocation6 [shape = 's32[1]{0}', space=sflag, size = 0x4, scoped, tag = 'scoped memory for tpu_custom_call.1']
    #allocation7 [shape = 'u8[65536]{0}', space=vmem, size = 0x10000, scoped, tag = 'input window, operand 2, single buffered']
    #allocation8 [shape = 's32[1]{0}', space=sflag, size = 0x4, scoped, tag = 'scoped memory for tpu_custom_call.1']
    #allocation9 [shape = 'u8[8192]{0}', space=vmem, size = 0x2000, scoped, tag = 'output window, operand 0, single buffered']
    %12 = vsyncpa [#allocation5], 0
    %13 = vsyncpa [#allocation8], 0
    %14 = vsyncpa [#allocation6], 0
    // Predicated region
    $region2: #{tpu_custom_call.1} parent=1 // pred_check
      _
    $region3: #{tpu_custom_call.1} parent=1 // pred_check_branch
      %16 = sbr.rel (0) target = $region5
    $region4: #{tpu_custom_call.1} parent=1 // pred_region
      %18 = vsyncadd [#allocation5], 0
      %s19 = sshll.u32 %s1, 4
      %s20 = int_to_ptr.hbm [resolvable:$true] %s19
      %s21 = sshll.u32 [#allocation4], 4
      %s22 = int_to_ptr.vmem [resolvable:$true] %s21
      %27 = dma.hbm_to_vmem [thread:$0]  %s20, 256, %s22, [#allocation5], 128, 128, 8
    $region5: #{tpu_custom_call.1} parent=1 // pred_fallthru
      _
    // Predicated region
    $region6: #{tpu_custom_call.1} parent=1 // pred_check
      _
    $region7: #{tpu_custom_call.1} parent=1 // pred_check_branch
      %29 = sbr.rel (0) target = $region9
    $region8: #{tpu_custom_call.1} parent=1 // pred_region
      %31 = vsyncadd [#allocation8], 0
      %s32 = sshll.u32 %s2, 4
      %s33 = int_to_ptr.hbm [resolvable:$true] %s32
      %s34 = sshll.u32 [#allocation7], 4
      %s35 = int_to_ptr.vmem [resolvable:$true] %s34
      %40 = dma.hbm_to_vmem [thread:$0]  %s33, 2048, %s35, [#allocation8], 128, 128, 8
    $region9: #{tpu_custom_call.1} parent=1 // pred_fallthru
      _
    // Predicated region
    $region10: #{tpu_custom_call.1} parent=1 // pred_check
      _
    $region11: #{tpu_custom_call.1} parent=1 // pred_check_branch
      %42 = sbr.rel (0) target = $region13
    $region12: #{tpu_custom_call.1} parent=1 // pred_region
      _
    $region13: #{tpu_custom_call.1} parent=1 // pred_fallthru
      _
    // Predicated region
    $region14: #{tpu_custom_call.1} parent=1 // pred_check
      _
    $region15: #{tpu_custom_call.1} parent=1 // pred_check_branch
      %44 = sbr.rel (0) target = $region17
    $region16: #{tpu_custom_call.1} parent=1 // pred_region
      _
    $region17: #{tpu_custom_call.1} parent=1 // pred_fallthru
      _
    // Predicated region
    $region18: #{tpu_custom_call.1} parent=1 // pred_check
      _
    $region19: #{tpu_custom_call.1} parent=1 // pred_check_branch
      %46 = sbr.rel (0) target = $region21
    $region20: #{tpu_custom_call.1} parent=1 // pred_region
      _
    $region21: #{tpu_custom_call.1} parent=1 // pred_fallthru
      _
    // Predicated region
    $region22: #{tpu_custom_call.1} parent=1 // pred_check
      _
    $region23: #{tpu_custom_call.1} parent=1 // pred_check_branch
      %48 = sbr.rel (0) target = $region25
    $region24: #{tpu_custom_call.1} parent=1 // pred_region
      %50 = dma.done [#allocation5], 256
    $region25: #{tpu_custom_call.1} parent=1 // pred_fallthru
      _
    // Predicated region
    $region26: #{tpu_custom_call.1} parent=1 // pred_check
      _
    $region27: #{tpu_custom_call.1} parent=1 // pred_check_branch
      %52 = sbr.rel (0) target = $region29
    $region28: #{tpu_custom_call.1} parent=1 // pred_region
      %54 = dma.done [#allocation8], 2048
    $region29: #{tpu_custom_call.1} parent=1 // pred_fallthru
      _
    %v55 = vld [vmem:[#allocation4] sm:$0xff]
    %v56 = vld [vmem:[#allocation4 + $0x8] sm:$0xff]
    %57 = vadd.xlane.f32.xlu0 %v55
    %v58 = vpop.xlane.xlu0 %57
    %59 = vadd.xlane.f32.xlu0 %v56
    %v60 = vpop.xlane.xlu0 %59
    %v61 = vrcp.pop 128.0
    %v62 = vmul.f32 128.0, %v61
    %v63 = vsub.f32 1.0, %v62
    %v64 = vmul.f32 %v61, %v63
    %v65 = vadd.f32 %v61, %v64
    %vm66 = vweird.f32 %v61
    %v67 = vsel %vm66, %v61, %v65
    %v68 = vmul.f32 %v58, %v67
    %v69 = vmul.f32 %v60, %v67
    %v70 = vsub.f32 %v55, %v68
    %v71 = vsub.f32 %v56, %v69
    %v72 = vmul.f32 %v70, %v70
    %v73 = vmul.f32 %v71, %v71
    %74 = vadd.xlane.f32.xlu0 %v72
    %v75 = vpop.xlane.xlu0 %74
    %76 = vadd.xlane.f32.xlu0 %v73
    %v77 = vpop.xlane.xlu0 %76
    %v78 = vmul.f32 %v75, %v67
    %v79 = vmul.f32 %v77, %v67
    %v80 = vadd.f32 %v78, 1e-05
    %v81 = vadd.f32 %v79, 1e-05
    %v82 = vrsqrt.pop %v80
    %v83 = vmul.f32 %v82, %v80
    %v84 = vmul.f32 %v83, %v82
    %v85 = vmul.f32 0.5, %v84
    %v86 = vsub.f32 1.5, %v85
    %v87 = vmul.f32 %v82, %v86
    %vm88 = vweird.f32 %v80
    %vm89 = vweird.f32 %v82
    %vm90 = vmor %vm88, %vm89
    %v91 = vsel %vm90, %v82, %v87
    %v92 = vrsqrt.pop %v81
    %v93 = vmul.f32 %v92, %v81
    %v94 = vmul.f32 %v93, %v92
    %v95 = vmul.f32 0.5, %v94
    %v96 = vsub.f32 1.5, %v95
    %v97 = vmul.f32 %v92, %v96
    %vm98 = vweird.f32 %v81
    %vm99 = vweird.f32 %v92
    %vm100 = vmor %vm98, %vm99
    %v101 = vsel %vm100, %v92, %v97
    %v102 = vmul.f32 %v70, %v91
    %v103 = vmul.f32 %v71, %v101
    %v104 = vld [vmem:[%s4] sm:$0x1]
    %v106 = vperm.slane %v104, 0
    %v108 = vmul.f32 %v102, %v106
    %v109 = vmul.f32 %v103, %v106
    %v110 = vld [vmem:[%s5] sm:$0x1]
    %v112 = vperm.slane %v110, 0
    %v114 = vadd.f32 %v108, %v112
    %v115 = vadd.f32 %v109, %v112
    %v116 = vld [vmem:[#allocation7] sm:$0xff]
    %v117 = vld [vmem:[#allocation7 + $0x8] sm:$0xff]
    %v118 = vld [vmem:[#allocation7 + $0x10] sm:$0xff]
    %v119 = vld [vmem:[#allocation7 + $0x18] sm:$0xff]
    %v120 = vld [vmem:[#allocation7 + $0x20] sm:$0xff]
    %v121 = vld [vmem:[#allocation7 + $0x28] sm:$0xff]
    %v122 = vld [vmem:[#allocation7 + $0x30] sm:$0xff]
    %v123 = vld [vmem:[#allocation7 + $0x38] sm:$0xff]
    %v124 = vld [vmem:[#allocation7 + $0x40] sm:$0xff]
    %v125 = vld [vmem:[#allocation7 + $0x48] sm:$0xff]
    %v126 = vld [vmem:[#allocation7 + $0x50] sm:$0xff]
    %v127 = vld [vmem:[#allocation7 + $0x58] sm:$0xff]
    %v128 = vld [vmem:[#allocation7 + $0x60] sm:$0xff]
    %v129 = vld [vmem:[#allocation7 + $0x68] sm:$0xff]
    %v130 = vld [vmem:[#allocation7 + $0x70] sm:$0xff]
    %v131 = vld [vmem:[#allocation7 + $0x78] sm:$0xff]
    %v132 = vld [vmem:[%s3] sm:$0x1]
    %v134 = vperm.slane %v132, 0
    %136 = vmatpush.msra.mxu0 %v131
    %137 = vmatpush.msra.mxu0 %v130
    %138 = vmatpush.msra.mxu0 %v129
    %139 = vmatpush.msra.mxu0 %v128
    %140 = vmatpush.msra.mxu0 %v127
    %141 = vmatpush.msra.mxu0 %v126
    %142 = vmatpush.msra.mxu0 %v125
    %143 = vmatpush.msra.mxu0 %v124
    %144 = vmatpush.msra.mxu0 %v123
    %145 = vmatpush.msra.mxu0 %v122
    %146 = vmatpush.msra.mxu0 %v121
    %147 = vmatpush.msra.mxu0 %v120
    %148 = vmatpush.msra.mxu0 %v119
    %149 = vmatpush.msra.mxu0 %v118
    %150 = vmatpush.msra.mxu0 %v117
    %151 = vmatpush.msra.mxu0 %v116
    %152 = vmatmul.f32.gmra.mxu0 %v114
    %v153 = vpop.f32.mrf.mxu0
    %v154 = vadd.f32 %v134, %v153
    %155 = vmatmul.f32.gmra.mxu0 %v115
    %v156 = vpop.f32.mrf.mxu0
    %v157 = vadd.f32 %v134, %v156
    %158 = vdwg.mxu0
    %v159 = vadd.f32 %v55, %v154
    %v160 = vadd.f32 %v56, %v157
    %161 = vst [vmem:[#allocation9] sm:$0xff] %v159
    %162 = vst [vmem:[#allocation9 + $0x8] sm:$0xff] %v160
    // Predicated region
    $region30: #{tpu_custom_call.1} parent=1 // pred_check
      _
    $region31: #{tpu_custom_call.1} parent=1 // pred_check_branch
      %164 = sbr.rel (0) target = $region33
    $region32: #{tpu_custom_call.1} parent=1 // pred_region
      %166 = vsyncadd [#allocation6], 0
      %s167 = sshll.u32 [#allocation9], 4
      %s168 = int_to_ptr.vmem [resolvable:$true] %s167
      %s169 = sshll.u32 %s6, 4
      %s170 = int_to_ptr.hbm [resolvable:$true] %s169
      %175 = dma.vmem_to_hbm [thread:$0]  %s168, 256, %s170, [#allocation6], 128, 128, 8
    $region33: #{tpu_custom_call.1} parent=1 // pred_fallthru
      _
    // Predicated region
    $region34: #{tpu_custom_call.1} parent=1 // pred_check
      _
    $region35: #{tpu_custom_call.1} parent=1 // pred_check_branch
      %177 = sbr.rel (0) target = $region37
    $region36: #{tpu_custom_call.1} parent=1 // pred_region
      %179 = dma.done [#allocation6], 256
    $region37: #{tpu_custom_call.1} parent=1 // pred_fallthru
      _
    %180 = vsyncpa [#allocation5], 1
    %181 = vsyncpa [#allocation8], 1
    %182 = vsyncpa [#allocation6], 1

</llo_original>
